<compile_context>
chip_gen: v7x
topology: tpu7x:2x2x1
jax: 0.10.0
libtpu: 0.0.40
codegen_flags: <defaults>
</compile_context>

<pallas_src>
import functools

import jax
import jax.numpy as jnp
from jax import lax
from jax.experimental import pallas as pl
from jax.experimental.pallas import tpu as pltpu

EPS = 1e-5
_DTYPES = {"float32": jnp.float32, "bfloat16": jnp.bfloat16}


def _non_lin(x, kind):
    if kind == "ReLU":
        return jnp.maximum(x, 0.0)
    if kind == "LeakyReLU":
        return jnp.where(x >= 0.0, x, 0.01 * x)   # PyTorch default slope 0.01
    if kind == "tanh":
        return jnp.tanh(x)
    raise ValueError(kind)


def _round_up(v, m):
    return ((v + m - 1) // m) * m


def _group_size(w, per_w_k, target=256):
    """Largest divisor g of w with g*per_w_k <= target (>=1): MXU K ~= target."""
    g = 1
    for d in range(1, w + 1):
        if w % d == 0 and d * per_w_k <= target:
            g = d
    return g


def _grouped_matmul(x, w, n_g, gk):
    """Block-diagonal matmul: every group of gk input lanes hits the SAME small
    (gk, gn) weight (the per-w block replicated inside one group)."""
    if n_g == 1:
        return jnp.dot(x, w, preferred_element_type=jnp.float32)
    parts = [jnp.dot(x[:, g * gk:(g + 1) * gk], w,
                     preferred_element_type=jnp.float32) for g in range(n_g)]
    return jnp.concatenate(parts, axis=1)


# --------------------------- kernels ---------------------------------------

def _pass1_kernel(a_ref, w1_ref, y1_ref, st_ref, *, n_g, gk):
    """y1 = conv1(A) for this row tile; write y1 + its partial (sum, ssq).

    Padded A rows are zero -> y1 rows are zero and contribute nothing to the
    moments (the true count is divided outside)."""
    y1 = _grouped_matmul(a_ref[...], w1_ref[...], n_g, gk)
    st_ref[...] = jnp.concatenate(
        [jnp.sum(y1, axis=0, keepdims=True),
         jnp.sum(y1 * y1, axis=0, keepdims=True)], axis=0)[None]
    y1_ref[...] = y1.astype(y1_ref.dtype)


def _pass2_kernel(y1_ref, w2_ref, s1_ref, b1_ref, st_ref, *,
                  non_lin, n_g, gk, tm, n_rows):
    """Partial (sum, ssq) of y2 = conv2(NonLin(BN1(y1))) for this tile."""
    y1 = y1_ref[...].astype(jnp.float32)
    z1 = _non_lin(y1 * s1_ref[...] + b1_ref[...], non_lin)
    # Mask padded rows (their z1 is NonLin(bias1) != 0) so they do not bias
    # the stage-2 statistics.
    row = pl.program_id(0) * tm + lax.broadcasted_iota(jnp.int32, (tm, 1), 0)
    z1 = jnp.where(row < n_rows, z1, 0.0)
    y2 = _grouped_matmul(z1.astype(w2_ref.dtype), w2_ref[...], n_g, gk)
    st_ref[...] = jnp.concatenate(
        [jnp.sum(y2, axis=0, keepdims=True),
         jnp.sum(y2 * y2, axis=0, keepdims=True)], axis=0)[None]


def _pass3_kernel(y1_ref, w2s_ref, s1_ref, b1_ref, b2_ref, o_ref, *,
                  non_lin, n_g, gk):
    """Apply pass: out = NonLin(conv2(NonLin(BN1(y1))) * scale2 + bias2).
    scale2 is pre-folded into w2s columns, so only the bias add remains."""
    y1 = y1_ref[...].astype(jnp.float32)
    z1 = _non_lin(y1 * s1_ref[...] + b1_ref[...], non_lin)
    y2s = _grouped_matmul(z1.astype(w2s_ref.dtype), w2s_ref[...], n_g, gk)
    o_ref[...] = _non_lin(y2s + b2_ref[...], non_lin).astype(o_ref.dtype)


# --------------------------- wrapper ----------------------------------------

@functools.partial(jax.jit,
                   static_argnames=("non_lin", "row_tile", "matmul_dtype"))
def block_height_reducing_filtering(x, params, non_lin="ReLU", row_tile=2048,
                                    matmul_dtype="float32"):
    """x: (N, C_in, H, W) float32 NCHW.  Returns (N, C_out, H//2, W) float32."""
    mdt = _DTYPES[matmul_dtype]
    item = jnp.dtype(mdt).itemsize
    w1, g1, b1, w2, g2, b2 = (params[k] for k in
                              ("w1", "gamma1", "beta1", "w2", "gamma2", "beta2"))
    N, C, H, W = x.shape
    assert H % 2 == 0
    Ho = H // 2
    Cout = w2.shape[0]
    R = N * Ho                                   # rows; lanes carry (w, channel)
    K1, K2, K3 = W * 2 * C, W * C, W * Cout      # lane widths of A, y1/z1, out

    # Lane-dense repack: A[n*Ho+ho, w*2C + ci*2 + kh] = x[n, ci, 2*ho+kh, w]
    # TODO(synk): with an NHWC contract this transpose round trip disappears.
    a = (x.reshape(N, C, Ho, 2, W).transpose(0, 2, 4, 1, 3)
          .reshape(R, K1).astype(mdt))

    # Grouped block-diagonal weights: G consecutive w's per MXU call, all groups
    # share one (G*k, G*n) weight -> FLOP waste capped at ~G, footprint bounded.
    b1m = w1[:, :, :, 0].transpose(1, 2, 0).reshape(2 * C, C).astype(jnp.float32)
    b2m = w2[:, :, 0, 0].T.astype(jnp.float32)                    # (C, Cout)
    G1 = _group_size(W, 2 * C)
    G2 = _group_size(W, C)
    nG1, gk1 = W // G1, G1 * 2 * C
    nG2, gk2 = W // G2, G2 * C
    w1g = jnp.kron(jnp.eye(G1, dtype=jnp.float32), b1m)           # (G1*2C, G1*C)
    w2g = jnp.kron(jnp.eye(G2, dtype=jnp.float32), b2m)           # (G2*C, G2*Cout)
    w1g_m = w1g.astype(mdt)
    w2g_m = w2g.astype(mdt)

    # Row-tile size from an explicit VMEM budget (double-buffered in+out tiles).
    # Budget of 28 MiB keeps the whole pipeline under v7x's 64 MiB VMEM while
    # still allowing multi-thousand-row tiles on v5e/v6e at small lane widths.
    bytes_per_row = 2 * max(K1 * item + K2 * item,     # pass 1: read A, write y1
                            K2 * item + K3 * 4)        # pass 3: read y1, write out
    budget = 28 << 20
    tm_budget = max(8, (budget // bytes_per_row) // 8 * 8)
    tm = max(8, (min(row_tile, tm_budget) // 8) * 8)
    r8 = _round_up(R, 8)
    if tm >= r8:
        # Whole problem fits one tile: keep >=2 tiles when there's enough work
        # so v7x's two TensorCores both get a share of the "parallel" axis.
        tm = _round_up(-(-R // 2), 8) if R >= 1024 else r8
    n_tiles = -(-R // tm)
    r_pad = n_tiles * tm
    if r_pad != R:
        a = jnp.pad(a, ((0, r_pad - R), (0, 0)))      # zero rows (see kernels)

    count = float(N * Ho * W)                    # BN sample count per channel
    vmem_limit = int(min(48 << 20, max(16 << 20, 2 * bytes_per_row * tm)))
    par = pltpu.CompilerParams(dimension_semantics=("parallel",),
                               vmem_limit_bytes=vmem_limit)

    def row_spec(width):
        return pl.BlockSpec((tm, width), lambda t: (t, 0))

    def full(arr):
        nd = arr.ndim
        return pl.BlockSpec(arr.shape, lambda t, _n=nd: (0,) * _n)

    def stat_spec(width):
        return pl.BlockSpec((1, 2, width), lambda t: (t, 0, 0))

    def stat_shape(width):
        return jax.ShapeDtypeStruct((n_tiles, 2, width), jnp.float32)

    # ---- pass 1: y1 = conv1(A), partial moments of y1 ------------------------
    y1_hbm, st1 = pl.pallas_call(
        functools.partial(_pass1_kernel, n_g=nG1, gk=gk1),
        grid=(n_tiles,),
        in_specs=[row_spec(K1), full(w1g_m)],
        out_specs=[row_spec(K2), stat_spec(K2)],
        out_shape=(jax.ShapeDtypeStruct((r_pad, K2), mdt), stat_shape(K2)),
        compiler_params=par,
    )(a, w1g_m)

    def fold(st, nch, gamma, beta):
        # Finish the tiny reduction (tiles, then over w inside the lane axis),
        # derive per-channel BN scale/bias once (f32).
        s = st[:, 0, :].sum(axis=0).reshape(W, nch).sum(axis=0)
        q = st[:, 1, :].sum(axis=0).reshape(W, nch).sum(axis=0)
        mu = s / count
        var = jnp.maximum(q / count - mu * mu, 0.0)   # one-pass E[x^2]-mu^2
        scale_c = gamma.astype(jnp.float32) * lax.rsqrt(var + EPS)
        bias_c = beta.astype(jnp.float32) - mu * scale_c
        return scale_c, bias_c

    scale1_c, bias1_c = fold(st1, C, g1, b1)
    scale1 = jnp.tile(scale1_c, W)[None, :]            # (1, K2) per-lane, f32
    bias1 = jnp.tile(bias1_c, W)[None, :]

    # ---- pass 2: partial moments of y2 = conv2(NonLin(BN1(y1))) ---------------
    st2 = pl.pallas_call(
        functools.partial(_pass2_kernel, non_lin=non_lin, n_g=nG2, gk=gk2,
                          tm=tm, n_rows=R),
        grid=(n_tiles,),
        in_specs=[row_spec(K2), full(w2g_m), full(scale1), full(bias1)],
        out_specs=stat_spec(K3),
        out_shape=stat_shape(K3),
        compiler_params=par,
    )(y1_hbm, w2g_m, scale1, bias1)

    scale2_c, bias2_c = fold(st2, Cout, g2, b2)
    # Fold BN2 scale into the conv2 weight columns (per-group column order is
    # (w_local, cout)); only the bias add remains in the apply kernel.
    w2gs = (w2g * jnp.tile(scale2_c, G2)[None, :]).astype(mdt)
    bias2 = jnp.tile(bias2_c, W)[None, :]              # (1, K3), f32

    # ---- pass 3: apply + lane-dense (N*Ho, W*Cout) output ---------------------
    out2d = pl.pallas_call(
        functools.partial(_pass3_kernel, non_lin=non_lin, n_g=nG2, gk=gk2),
        grid=(n_tiles,),
        in_specs=[row_spec(K2), full(w2gs), full(scale1), full(bias1),
                  full(bias2)],
        out_specs=row_spec(K3),
        out_shape=jax.ShapeDtypeStruct((r_pad, K3), jnp.float32),
        compiler_params=par,
    )(y1_hbm, w2gs, scale1, bias1, bias2)

    # back to NCHW (drop padded rows)
    return out2d[:R].reshape(N, Ho, W, Cout).transpose(0, 3, 1, 2)


# --------------------------- reference ---------------------------------------

def _reference(x, params, non_lin="ReLU"):
    """Pure-JAX reference (same math, no Pallas)."""
    w1, g1, b1, w2, g2, b2 = (params[k] for k in
                              ("w1", "gamma1", "beta1", "w2", "gamma2", "beta2"))

    def bn(y, g, b):
        mu = jnp.mean(y, axis=(0, 2, 3), keepdims=True)
        var = jnp.mean((y - mu) ** 2, axis=(0, 2, 3), keepdims=True)
        return ((y - mu) * lax.rsqrt(var + EPS) * g[None, :, None, None]
                + b[None, :, None, None])

    y1 = lax.conv_general_dilated(x, w1, window_strides=(2, 1), padding="VALID",
                                  dimension_numbers=("NCHW", "OIHW", "NCHW"))
    z1 = _non_lin(bn(y1, g1, b1), non_lin)
    y2 = lax.conv_general_dilated(z1, w2, window_strides=(1, 1), padding="VALID",
                                  dimension_numbers=("NCHW", "OIHW", "NCHW"))
    return _non_lin(bn(y2, g2, b2), non_lin)


if __name__ == "__main__":
    # Small shapes: N=2, C_in=4, H=16, W=16, C_out=8
    N, Cin, H, W, Cout = 2, 4, 16, 16, 8
    key = jax.random.PRNGKey(0)
    k = jax.random.split(key, 7)

    x = jax.random.normal(k[0], (N, Cin, H, W), jnp.float32)
    params = dict(
        w1=jax.random.normal(k[1], (Cin, Cin, 2, 1), jnp.float32) * 0.3,
        gamma1=jax.random.normal(k[2], (Cin,), jnp.float32) * 0.1 + 1.0,
        beta1=jax.random.normal(k[3], (Cin,), jnp.float32) * 0.1,
        w2=jax.random.normal(k[4], (Cout, Cin, 1, 1), jnp.float32) * 0.3,
        gamma2=jax.random.normal(k[5], (Cout,), jnp.float32) * 0.1 + 1.0,
        beta2=jax.random.normal(k[6], (Cout,), jnp.float32) * 0.1,
    )

    # 1) f32 path, ReLU.
    out = jax.block_until_ready(
        block_height_reducing_filtering(x, params, non_lin="ReLU"))
    assert out.shape == (N, Cout, H // 2, W), out.shape
    ref = jax.block_until_ready(_reference(x, params, non_lin="ReLU"))
    err = float(jnp.max(jnp.abs(out - ref)))
    assert jnp.allclose(out, ref, atol=1e-4, rtol=1e-4), err

    # 2) Multi-tile + padded-row path (R=10 rows, tile=8 -> 2 tiles), LeakyReLU.
    x2 = jax.random.normal(k[1], (1, Cin, 20, W), jnp.float32)
    out2 = jax.block_until_ready(
        block_height_reducing_filtering(x2, params, non_lin="LeakyReLU",
                                        row_tile=8))
    ref2 = jax.block_until_ready(_reference(x2, params, non_lin="LeakyReLU"))
    err2 = float(jnp.max(jnp.abs(out2 - ref2)))
    assert out2.shape == (1, Cout, 10, W), out2.shape
    assert jnp.allclose(out2, ref2, atol=1e-4, rtol=1e-4), err2

    # 3) Wide-W path exercising the grouped block-diagonal weights (n_groups>1).
    x3 = jax.random.normal(k[2], (2, Cin, 8, 128), jnp.float32)
    out3 = jax.block_until_ready(
        block_height_reducing_filtering(x3, params, non_lin="ReLU"))
    ref3 = jax.block_until_ready(_reference(x3, params, non_lin="ReLU"))
    err3 = float(jnp.max(jnp.abs(out3 - ref3)))
    assert out3.shape == (2, Cout, 4, 128), out3.shape
    assert jnp.allclose(out3, ref3, atol=1e-4, rtol=1e-4), err3

    # 4) bf16 MXU path (v6e/v7x): f32 accumulation/stats/affine, loose tolerance.
    out4 = jax.block_until_ready(
        block_height_reducing_filtering(x, params, non_lin="tanh",
                                        matmul_dtype="bfloat16"))
    ref4 = jax.block_until_ready(_reference(x, params, non_lin="tanh"))
    assert out4.shape == ref4.shape
    rel = float(jnp.linalg.norm(out4 - ref4) / jnp.linalg.norm(ref4))
    assert rel < 5e-2, rel

    print("KERNEL_OK")
</pallas_src>

<mosaic_0001>
module attributes {stable_mosaic.version = 11 : i64} {
  func.func @_pass1_kernel(%arg0: i32, %arg1: memref<16x128xf32, #tpu.memory_space<vmem>>, %arg2: memref<128x64xf32, #tpu.memory_space<vmem>>, %arg3: memref<16x64xf32, #tpu.memory_space<vmem>>, %arg4: memref<1x2x64xf32, #tpu.memory_space<vmem>>) attributes {dimension_semantics = [#tpu.dimension_semantics<parallel>], iteration_bounds = array<i64: 1>, scalar_prefetch = 0 : i64, scratch_operands = 0 : i64, tpu.core_type = #tpu.core_type<tc>, window_params = [{transform_indices = @transform_0, window_bounds = array<i64: 16, 128>}, {pipeline_mode = #tpu.pipeline_mode<synchronous>, transform_indices = @transform_1, window_bounds = array<i64: 128, 64>}, {transform_indices = @transform_2, window_bounds = array<i64: 16, 64>}, {transform_indices = @transform_3, window_bounds = array<i64: 1, 2, 64>}]} {
    %c0 = arith.constant 0 : index
    %c0_0 = arith.constant 0 : index
    %0 = vector.load %arg1[%c0, %c0_0] : memref<16x128xf32, #tpu.memory_space<vmem>>, vector<16x128xf32>
    %c0_1 = arith.constant 0 : index
    %c0_2 = arith.constant 0 : index
    %1 = vector.load %arg2[%c0_1, %c0_2] : memref<128x64xf32, #tpu.memory_space<vmem>>, vector<128x64xf32>
    %cst = arith.constant dense<0.000000e+00> : vector<16x64xf32>
    %2 = tpu.matmul %0, %1, %cst {dimension_numbers = #tpu.dot_dimension_numbers<[1], [0], [0], [1], [0, 0, 1, 1], [], []>} : vector<16x128xf32>, vector<128x64xf32>, vector<16x64xf32> -> vector<16x64xf32>
    %cst_3 = arith.constant dense<0.000000e+00> : vector<64xf32>
    %3 = vector.multi_reduction <add>, %2, %cst_3 [0] : vector<16x64xf32> to vector<64xf32>
    %4 = vector.shape_cast %3 : vector<64xf32> to vector<1x64xf32>
    %5 = arith.mulf %2, %2 : vector<16x64xf32>
    %cst_4 = arith.constant dense<0.000000e+00> : vector<64xf32>
    %6 = vector.multi_reduction <add>, %5, %cst_4 [0] : vector<16x64xf32> to vector<64xf32>
    %7 = vector.shape_cast %6 : vector<64xf32> to vector<1x64xf32>
    %8 = tpu.concatenate %4, %7 in 0 : vector<1x64xf32>, vector<1x64xf32> -> vector<2x64xf32>
    %9 = vector.shape_cast %8 : vector<2x64xf32> to vector<1x2x64xf32>
    %c0_5 = arith.constant 0 : index
    %c0_6 = arith.constant 0 : index
    %c0_7 = arith.constant 0 : index
    %10 = vector.load %arg4[%c0_5, %c0_6, %c0_7] : memref<1x2x64xf32, #tpu.memory_space<vmem>>, vector<1x2x64xf32>
    tpu.vector_store %arg4[%c0_5, %c0_6, %c0_7], %9 {strides = array<i32>} : memref<1x2x64xf32, #tpu.memory_space<vmem>>, vector<1x2x64xf32>,
    %c0_8 = arith.constant 0 : index
    %c0_9 = arith.constant 0 : index
    %11 = vector.load %arg3[%c0_8, %c0_9] : memref<16x64xf32, #tpu.memory_space<vmem>>, vector<16x64xf32>
    tpu.vector_store %arg3[%c0_8, %c0_9], %2 {strides = array<i32>} : memref<16x64xf32, #tpu.memory_space<vmem>>, vector<16x64xf32>,
    return
  }
  func.func @transform_0(%arg0: i32) -> (i32, i32) {
    %c0_i32 = arith.constant 0 : i32
    %c0_i32_0 = arith.constant 0 : i32
    return %arg0, %c0_i32 : i32, i32
  }
  func.func @transform_1(%arg0: i32) -> (i32, i32) {
    %c0_i32 = arith.constant 0 : i32
    %c0_i32_0 = arith.constant 0 : i32
    %c0_i32_1 = arith.constant 0 : i32
    return %c0_i32, %c0_i32_0 : i32, i32
  }
  func.func @transform_2(%arg0: i32) -> (i32, i32) {
    %c0_i32 = arith.constant 0 : i32
    %c0_i32_0 = arith.constant 0 : i32
    return %arg0, %c0_i32 : i32, i32
  }
  func.func @transform_3(%arg0: i32) -> (i32, i32, i32) {
    %c0_i32 = arith.constant 0 : i32
    %c0_i32_0 = arith.constant 0 : i32
    %c0_i32_1 = arith.constant 0 : i32
    return %arg0, %c0_i32, %c0_i32_0 : i32, i32, i32
  }
}

module attributes {stable_mosaic.version = 11 : i64} {
  func.func @_pass2_kernel(%arg0: i32, %arg1: memref<16x64xf32, #tpu.memory_space<vmem>>, %arg2: memref<64x128xf32, #tpu.memory_space<vmem>>, %arg3: memref<1x64xf32, #tpu.memory_space<vmem>>, %arg4: memref<1x64xf32, #tpu.memory_space<vmem>>, %arg5: memref<1x2x128xf32, #tpu.memory_space<vmem>>) attributes {dimension_semantics = [#tpu.dimension_semantics<parallel>], iteration_bounds = array<i64: 1>, scalar_prefetch = 0 : i64, scratch_operands = 0 : i64, tpu.core_type = #tpu.core_type<tc>, window_params = [{transform_indices = @transform_0, window_bounds = array<i64: 16, 64>}, {pipeline_mode = #tpu.pipeline_mode<synchronous>, transform_indices = @transform_1, window_bounds = array<i64: 64, 128>}, {pipeline_mode = #tpu.pipeline_mode<synchronous>, transform_indices = @transform_2, window_bounds = array<i64: 1, 64>}, {pipeline_mode = #tpu.pipeline_mode<synchronous>, transform_indices = @transform_3, window_bounds = array<i64: 1, 64>}, {transform_indices = @transform_4, window_bounds = array<i64: 1, 2, 128>}]} {
    %c0 = arith.constant 0 : index
    %c0_0 = arith.constant 0 : index
    %0 = vector.load %arg1[%c0, %c0_0] : memref<16x64xf32, #tpu.memory_space<vmem>>, vector<16x64xf32>
    %c0_1 = arith.constant 0 : index
    %c0_2 = arith.constant 0 : index
    %1 = vector.load %arg3[%c0_1, %c0_2] : memref<1x64xf32, #tpu.memory_space<vmem>>, vector<1x64xf32>
    %2 = vector.broadcast %1 : vector<1x64xf32> to vector<16x64xf32>
    %3 = arith.mulf %0, %2 : vector<16x64xf32>
    %c0_3 = arith.constant 0 : index
    %c0_4 = arith.constant 0 : index
    %4 = vector.load %arg4[%c0_3, %c0_4] : memref<1x64xf32, #tpu.memory_space<vmem>>, vector<1x64xf32>
    %5 = vector.broadcast %4 : vector<1x64xf32> to vector<16x64xf32>
    %6 = arith.addf %3, %5 : vector<16x64xf32>
    %cst = arith.constant 0.000000e+00 : f32
    %7 = vector.broadcast %cst : f32 to vector<16x64xf32>
    %8 = arith.maximumf %6, %7 : vector<16x64xf32>
    %c16_i32 = arith.constant 16 : i32
    %9 = arith.muli %arg0, %c16_i32 : i32
    %10 = tpu.iota {dimensions = array<i32: 0>} : vector<16x1xi32>
    %11 = vector.broadcast %9 : i32 to vector<16x1xi32>
    %12 = arith.addi %11, %10 : vector<16x1xi32>
    %c16_i32_5 = arith.constant 16 : i32
    %13 = vector.broadcast %c16_i32_5 : i32 to vector<16x1xi32>
    %14 = arith.cmpi slt, %12, %13 : vector<16x1xi32>
    %cst_6 = arith.constant 0.000000e+00 : f32
    %15 = vector.shape_cast %14 : vector<16x1xi1> to vector<16x1xi1>
    %16 = vector.broadcast %15 : vector<16x1xi1> to vector<16x64xi1>
    %17 = vector.broadcast %cst_6 : f32 to vector<16x64xf32>
    %18 = arith.select %16, %8, %17 : vector<16x64xi1>, vector<16x64xf32>
    %c0_7 = arith.constant 0 : index
    %c0_8 = arith.constant 0 : index
    %19 = vector.load %arg2[%c0_7, %c0_8] : memref<64x128xf32, #tpu.memory_space<vmem>>, vector<64x128xf32>
    %cst_9 = arith.constant dense<0.000000e+00> : vector<16x128xf32>
    %20 = tpu.matmul %18, %19, %cst_9 {dimension_numbers = #tpu.dot_dimension_numbers<[1], [0], [0], [1], [0, 0, 1, 1], [], []>} : vector<16x64xf32>, vector<64x128xf32>, vector<16x128xf32> -> vector<16x128xf32>
    %cst_10 = arith.constant dense<0.000000e+00> : vector<128xf32>
    %21 = vector.multi_reduction <add>, %20, %cst_10 [0] : vector<16x128xf32> to vector<128xf32>
    %22 = vector.shape_cast %21 : vector<128xf32> to vector<1x128xf32>
    %23 = arith.mulf %20, %20 : vector<16x128xf32>
    %cst_11 = arith.constant dense<0.000000e+00> : vector<128xf32>
    %24 = vector.multi_reduction <add>, %23, %cst_11 [0] : vector<16x128xf32> to vector<128xf32>
    %25 = vector.shape_cast %24 : vector<128xf32> to vector<1x128xf32>
    %26 = tpu.concatenate %22, %25 in 0 : vector<1x128xf32>, vector<1x128xf32> -> vector<2x128xf32>
    %27 = vector.shape_cast %26 : vector<2x128xf32> to vector<1x2x128xf32>
    %c0_12 = arith.constant 0 : index
    %c0_13 = arith.constant 0 : index
    %c0_14 = arith.constant 0 : index
    %28 = vector.load %arg5[%c0_12, %c0_13, %c0_14] : memref<1x2x128xf32, #tpu.memory_space<vmem>>, vector<1x2x128xf32>
    tpu.vector_store %arg5[%c0_12, %c0_13, %c0_14], %27 {strides = array<i32>} : memref<1x2x128xf32, #tpu.memory_space<vmem>>, vector<1x2x128xf32>,
    return
  }
  func.func @transform_0(%arg0: i32) -> (i32, i32) {
    %c0_i32 = arith.constant 0 : i32
    %c0_i32_0 = arith.constant 0 : i32
    return %arg0, %c0_i32 : i32, i32
  }
  func.func @transform_1(%arg0: i32) -> (i32, i32) {
    %c0_i32 = arith.constant 0 : i32
    %c0_i32_0 = arith.constant 0 : i32
    %c0_i32_1 = arith.constant 0 : i32
    return %c0_i32, %c0_i32_0 : i32, i32
  }
  func.func @transform_2(%arg0: i32) -> (i32, i32) {
    %c0_i32 = arith.constant 0 : i32
    %c0_i32_0 = arith.constant 0 : i32
    %c0_i32_1 = arith.constant 0 : i32
    return %c0_i32, %c0_i32_0 : i32, i32
  }
  func.func @transform_3(%arg0: i32) -> (i32, i32) {
    %c0_i32 = arith.constant 0 : i32
    %c0_i32_0 = arith.constant 0 : i32
    %c0_i32_1 = arith.constant 0 : i32
    return %c0_i32, %c0_i32_0 : i32, i32
  }
  func.func @transform_4(%arg0: i32) -> (i32, i32, i32) {
    %c0_i32 = arith.constant 0 : i32
    %c0_i32_0 = arith.constant 0 : i32
    %c0_i32_1 = arith.constant 0 : i32
    return %arg0, %c0_i32, %c0_i32_0 : i32, i32, i32
  }
}

module attributes {stable_mosaic.version = 11 : i64} {
  func.func @_pass3_kernel(%arg0: i32, %arg1: memref<16x64xf32, #tpu.memory_space<vmem>>, %arg2: memref<64x128xf32, #tpu.memory_space<vmem>>, %arg3: memref<1x64xf32, #tpu.memory_space<vmem>>, %arg4: memref<1x64xf32, #tpu.memory_space<vmem>>, %arg5: memref<1x128xf32, #tpu.memory_space<vmem>>, %arg6: memref<16x128xf32, #tpu.memory_space<vmem>>) attributes {dimension_semantics = [#tpu.dimension_semantics<parallel>], iteration_bounds = array<i64: 1>, scalar_prefetch = 0 : i64, scratch_operands = 0 : i64, tpu.core_type = #tpu.core_type<tc>, window_params = [{transform_indices = @transform_0, window_bounds = array<i64: 16, 64>}, {pipeline_mode = #tpu.pipeline_mode<synchronous>, transform_indices = @transform_1, window_bounds = array<i64: 64, 128>}, {pipeline_mode = #tpu.pipeline_mode<synchronous>, transform_indices = @transform_2, window_bounds = array<i64: 1, 64>}, {pipeline_mode = #tpu.pipeline_mode<synchronous>, transform_indices = @transform_3, window_bounds = array<i64: 1, 64>}, {pipeline_mode = #tpu.pipeline_mode<synchronous>, transform_indices = @transform_4, window_bounds = array<i64: 1, 128>}, {transform_indices = @transform_5, window_bounds = array<i64: 16, 128>}]} {
    %c0 = arith.constant 0 : index
    %c0_0 = arith.constant 0 : index
    %0 = vector.load %arg1[%c0, %c0_0] : memref<16x64xf32, #tpu.memory_space<vmem>>, vector<16x64xf32>
    %c0_1 = arith.constant 0 : index
    %c0_2 = arith.constant 0 : index
    %1 = vector.load %arg3[%c0_1, %c0_2] : memref<1x64xf32, #tpu.memory_space<vmem>>, vector<1x64xf32>
    %2 = vector.broadcast %1 : vector<1x64xf32> to vector<16x64xf32>
    %3 = arith.mulf %0, %2 : vector<16x64xf32>
    %c0_3 = arith.constant 0 : index
    %c0_4 = arith.constant 0 : index
    %4 = vector.load %arg4[%c0_3, %c0_4] : memref<1x64xf32, #tpu.memory_space<vmem>>, vector<1x64xf32>
    %5 = vector.broadcast %4 : vector<1x64xf32> to vector<16x64xf32>
    %6 = arith.addf %3, %5 : vector<16x64xf32>
    %cst = arith.constant 0.000000e+00 : f32
    %7 = vector.broadcast %cst : f32 to vector<16x64xf32>
    %8 = arith.maximumf %6, %7 : vector<16x64xf32>
    %c0_5 = arith.constant 0 : index
    %c0_6 = arith.constant 0 : index
    %9 = vector.load %arg2[%c0_5, %c0_6] : memref<64x128xf32, #tpu.memory_space<vmem>>, vector<64x128xf32>
    %cst_7 = arith.constant dense<0.000000e+00> : vector<16x128xf32>
    %10 = tpu.matmul %8, %9, %cst_7 {dimension_numbers = #tpu.dot_dimension_numbers<[1], [0], [0], [1], [0, 0, 1, 1], [], []>} : vector<16x64xf32>, vector<64x128xf32>, vector<16x128xf32> -> vector<16x128xf32>
    %c0_8 = arith.constant 0 : index
    %c0_9 = arith.constant 0 : index
    %11 = vector.load %arg5[%c0_8, %c0_9] : memref<1x128xf32, #tpu.memory_space<vmem>>, vector<1x128xf32>
    %12 = vector.broadcast %11 : vector<1x128xf32> to vector<16x128xf32>
    %13 = arith.addf %10, %12 : vector<16x128xf32>
    %cst_10 = arith.constant 0.000000e+00 : f32
    %14 = vector.broadcast %cst_10 : f32 to vector<16x128xf32>
    %15 = arith.maximumf %13, %14 : vector<16x128xf32>
    %c0_11 = arith.constant 0 : index
    %c0_12 = arith.constant 0 : index
    %16 = vector.load %arg6[%c0_11, %c0_12] : memref<16x128xf32, #tpu.memory_space<vmem>>, vector<16x128xf32>
    tpu.vector_store %arg6[%c0_11, %c0_12], %15 {strides = array<i32>} : memref<16x128xf32, #tpu.memory_space<vmem>>, vector<16x128xf32>,
    return
  }
  func.func @transform_0(%arg0: i32) -> (i32, i32) {
    %c0_i32 = arith.constant 0 : i32
    %c0_i32_0 = arith.constant 0 : i32
    return %arg0, %c0_i32 : i32, i32
  }
  func.func @transform_1(%arg0: i32) -> (i32, i32) {
    %c0_i32 = arith.constant 0 : i32
    %c0_i32_0 = arith.constant 0 : i32
    %c0_i32_1 = arith.constant 0 : i32
    return %c0_i32, %c0_i32_0 : i32, i32
  }
  func.func @transform_2(%arg0: i32) -> (i32, i32) {
    %c0_i32 = arith.constant 0 : i32
    %c0_i32_0 = arith.constant 0 : i32
    %c0_i32_1 = arith.constant 0 : i32
    return %c0_i32, %c0_i32_0 : i32, i32
  }
  func.func @transform_3(%arg0: i32) -> (i32, i32) {
    %c0_i32 = arith.constant 0 : i32
    %c0_i32_0 = arith.constant 0 : i32
    %c0_i32_1 = arith.constant 0 : i32
    return %c0_i32, %c0_i32_0 : i32, i32
  }
  func.func @transform_4(%arg0: i32) -> (i32, i32) {
    %c0_i32 = arith.constant 0 : i32
    %c0_i32_0 = arith.constant 0 : i32
    %c0_i32_1 = arith.constant 0 : i32
    return %c0_i32, %c0_i32_0 : i32, i32
  }
  func.func @transform_5(%arg0: i32) -> (i32, i32) {
    %c0_i32 = arith.constant 0 : i32
    %c0_i32_0 = arith.constant 0 : i32
    return %arg0, %c0_i32 : i32, i32
  }
}

</mosaic_0001>

<llo_original>
// kernel: tile.23
$region0: #{tile.23}
  #allocation0 [shape = 's32[1]{0}', space=sflag, size = 0x4, scoped, tag = 'scoped memory for tile.23']
  %s0 = inlined_call_operand.vmem [shape: f32[4], index: 0, kind: input, shape index: {}]
  %s1 = inlined_call_operand.vmem [shape: f32[16,4], index: 1, kind: output, shape index: {}]
  // Predicated region
  $region2: #{tile.23} parent=0 // pred_check
    _
  $region3: #{tile.23} parent=0 // pred_check_branch
    %3 = sbr.rel (0) target = $region5
  $region4: #{tile.23} parent=0 // pred_region
    _
  $region5: #{tile.23} parent=0 // pred_fallthru
    _
  %v4 = vld [vmem:[%s0] ss:$0 sm:$0xff]
  %5 = vst [vmem:[%s1] sm:$0xff] %v4
  %s6 = scalar_lea.vmem %s1, 8
  %7 = vst [vmem:[%s6] sm:$0xff] %v4

// kernel: tile.24
$region0: #{tile.24}
  %s0 = inlined_call_operand.vmem [shape: f32[16,4], index: 0, kind: input, shape index: {}]
  %s1 = inlined_call_operand.vmem [shape: f32[1,64], index: 1, kind: output, shape index: {}]
  $region1: #{tile.24} parent=0
    #allocation0 [shape = 'u8[4096]{0}', space=vmem, size = 0x1000, scoped, tag = 'scoped mem for output reshape']
    %v2 = vld [vmem:[%s0] sm:$0x1]
    %vm3 = vcmask 31744
    %4 = vst.msk [vmem:[#allocation0] sm:$0x1] %vm3, %v2
    %s5 = scalar_lea.vmem %s0, 15
    %v6 = vld [vmem:[%s5] sm:$0x1]
    %7 = vrot.lane.b32.xlu0 %v6, 60
    %v8 = vpop.permute.xlu0 %7
    %vm9 = vcmask 523744
    %10 = vst.msk [vmem:[#allocation0] sm:$0x1] %vm9, %v8
    %s11 = scalar_lea.vmem %s0, 14
    %v12 = vld [vmem:[%s11] sm:$0x1]
    %13 = vrot.lane.b32.xlu0 %v12, 56
    %v14 = vpop.permute.xlu0 %13
    %vm15 = vcmask 490944
    %16 = vst.msk [vmem:[#allocation0] sm:$0x1] %vm15, %v14
    %s17 = scalar_lea.vmem %s0, 13
    %v18 = vld [vmem:[%s17] sm:$0x1]
    %19 = vrot.lane.b32.xlu0 %v18, 52
    %v20 = vpop.permute.xlu0 %19
    %vm21 = vcmask 458144
    %22 = vst.msk [vmem:[#allocation0] sm:$0x1] %vm21, %v20
    %s23 = scalar_lea.vmem %s0, 12
    %v24 = vld [vmem:[%s23] sm:$0x1]
    %25 = vrot.lane.b32.xlu0 %v24, 48
    %v26 = vpop.permute.xlu0 %25
    %vm27 = vcmask 425344
    %28 = vst.msk [vmem:[#allocation0] sm:$0x1] %vm27, %v26
    %s29 = scalar_lea.vmem %s0, 11
    %v30 = vld [vmem:[%s29] sm:$0x1]
    %31 = vrot.lane.b32.xlu0 %v30, 44
    %v32 = vpop.permute.xlu0 %31
    %vm33 = vcmask 392544
    %34 = vst.msk [vmem:[#allocation0] sm:$0x1] %vm33, %v32
    %s35 = scalar_lea.vmem %s0, 10
    %v36 = vld [vmem:[%s35] sm:$0x1]
    %37 = vrot.lane.b32.xlu0 %v36, 40
    %v38 = vpop.permute.xlu0 %37
    %vm39 = vcmask 359744
    %40 = vst.msk [vmem:[#allocation0] sm:$0x1] %vm39, %v38
    %s41 = scalar_lea.vmem %s0, 9
    %v42 = vld [vmem:[%s41] sm:$0x1]
    %43 = vrot.lane.b32.xlu0 %v42, 36
    %v44 = vpop.permute.xlu0 %43
    %vm45 = vcmask 326944
    %46 = vst.msk [vmem:[#allocation0] sm:$0x1] %vm45, %v44
    %s47 = scalar_lea.vmem %s0, 8
    %v48 = vld [vmem:[%s47] sm:$0x1]
    %49 = vrot.lane.b32.xlu0 %v48, 32
    %v50 = vpop.permute.xlu0 %49
    %vm51 = vcmask 294144
    %52 = vst.msk [vmem:[#allocation0] sm:$0x1] %vm51, %v50
    %s53 = scalar_lea.vmem %s0, 7
    %v54 = vld [vmem:[%s53] sm:$0x1]
    %55 = vrot.lane.b32.xlu0 %v54, 28
    %v56 = vpop.permute.xlu0 %55
    %vm57 = vcmask 261344
    %58 = vst.msk [vmem:[#allocation0] sm:$0x1] %vm57, %v56
    %s59 = scalar_lea.vmem %s0, 6
    %v60 = vld [vmem:[%s59] sm:$0x1]
    %61 = vrot.lane.b32.xlu0 %v60, 24
    %v62 = vpop.permute.xlu0 %61
    %vm63 = vcmask 228544
    %64 = vst.msk [vmem:[#allocation0] sm:$0x1] %vm63, %v62
    %s65 = scalar_lea.vmem %s0, 5
    %v66 = vld [vmem:[%s65] sm:$0x1]
    %67 = vrot.lane.b32.xlu0 %v66, 20
    %v68 = vpop.permute.xlu0 %67
    %vm69 = vcmask 195744
    %70 = vst.msk [vmem:[#allocation0] sm:$0x1] %vm69, %v68
    %s71 = scalar_lea.vmem %s0, 4
    %v72 = vld [vmem:[%s71] sm:$0x1]
    %73 = vrot.lane.b32.xlu0 %v72, 16
    %v74 = vpop.permute.xlu0 %73
    %vm75 = vcmask 162944
    %76 = vst.msk [vmem:[#allocation0] sm:$0x1] %vm75, %v74
    %s77 = scalar_lea.vmem %s0, 3
    %v78 = vld [vmem:[%s77] sm:$0x1]
    %79 = vrot.lane.b32.xlu0 %v78, 12
    %v80 = vpop.permute.xlu0 %79
    %vm81 = vcmask 130144
    %82 = vst.msk [vmem:[#allocation0] sm:$0x1] %vm81, %v80
    %s83 = scalar_lea.vmem %s0, 2
    %v84 = vld [vmem:[%s83] sm:$0x1]
    %85 = vrot.lane.b32.xlu0 %v84, 8
    %v86 = vpop.permute.xlu0 %85
    %vm87 = vcmask 97344
    %88 = vst.msk [vmem:[#allocation0] sm:$0x1] %vm87, %v86
    %s89 = scalar_lea.vmem %s0, 1
    %v90 = vld [vmem:[%s89] sm:$0x1]
    %91 = vrot.lane.b32.xlu0 %v90, 4
    %v92 = vpop.permute.xlu0 %91
    %vm93 = vcmask 64544
    %94 = vst.msk [vmem:[#allocation0] sm:$0x1] %vm93, %v92
    %s96 = sshllo.u32 0, 1
    %v98 = vld [vmem:[#allocation0] sm:%s96]
    %s99 = sshllo.u32 0, 1
    %100 = vst [vmem:[%s1] sm:%s99] %v98

// kernel: block_height_reducing_filtering.3
$region0: #{block_height_reducing_filtering.3}
  #allocation0 [shape = 'u32[]', space=smem, size = 0x4, offset = 0x4, fixed_abs, tag = 'smem constant byte address 0x4 - core index']
  #allocation1 [shape = 'u32[144,128]{1,0:T(1,128)}', space=vmem, size = 0x12000, scoped, tag = 'internal scratch']
  %s0 = inlined_call_operand.vmem [shape: f32[16,128], index: 0, kind: input, shape index: {}]
  %s1 = inlined_call_operand.vmem [shape: f32[128,64], index: 1, kind: input, shape index: {}]
  %s2 = inlined_call_operand.vmem [shape: f32[16,64], index: 2, kind: output, shape index: {0}]
  %s3 = inlined_call_operand.vmem [shape: f32[1,2,64], index: 3, kind: output, shape index: {1}]
  %4 = xla_tuple %s2, %s3
  %s5 = sld [smem:[#allocation0]]
  $region26: #{block_height_reducing_filtering.3} parent=0
    _
  %s7 = ssub.s32 1, %s5
  %s8 = scalar_select 0, %s7, %s5
  // Predicated region
  $region2: #{block_height_reducing_filtering.3} parent=0 // pred_check
    _
  $region3: #{block_height_reducing_filtering.3} parent=0 // pred_check_branch
    %10 = sbr.rel (0) target = $region5
  $region4: #{block_height_reducing_filtering.3} parent=0 // pred_region
    _
  $region5: #{block_height_reducing_filtering.3} parent=0 // pred_fallthru
    _
  // Predicated region
  $region6: #{block_height_reducing_filtering.3} parent=0 // pred_check
    _
  $region7: #{block_height_reducing_filtering.3} parent=0 // pred_check_branch
    %12 = sbr.rel (0) target = $region9
  $region8: #{block_height_reducing_filtering.3} parent=0 // pred_region
    _
  $region9: #{block_height_reducing_filtering.3} parent=0 // pred_fallthru
    _
  %v13 = vld [vmem:[%s0] sm:$0xff]
  %v14 = vld [vmem:[%s0 + $0x8] sm:$0xff]
  %v15 = vld [vmem:[%s1] sm:$0xff]
  %v16 = vld [vmem:[%s1 + $0x8] sm:$0xff]
  %v17 = vld [vmem:[%s1 + $0x10] sm:$0xff]
  %v18 = vld [vmem:[%s1 + $0x18] sm:$0xff]
  %v19 = vld [vmem:[%s1 + $0x20] sm:$0xff]
  %v20 = vld [vmem:[%s1 + $0x28] sm:$0xff]
  %v21 = vld [vmem:[%s1 + $0x30] sm:$0xff]
  %v22 = vld [vmem:[%s1 + $0x38] sm:$0xff]
  %v23 = vld [vmem:[%s1 + $0x40] sm:$0xff]
  %v24 = vld [vmem:[%s1 + $0x48] sm:$0xff]
  %v25 = vld [vmem:[%s1 + $0x50] sm:$0xff]
  %v26 = vld [vmem:[%s1 + $0x58] sm:$0xff]
  %v27 = vld [vmem:[%s1 + $0x60] sm:$0xff]
  %v28 = vld [vmem:[%s1 + $0x68] sm:$0xff]
  %v29 = vld [vmem:[%s1 + $0x70] sm:$0xff]
  %v30 = vld [vmem:[%s1 + $0x78] sm:$0xff]
  %31 = vmatprep.subr.mxu0 0.0
  %32 = vmatpush1.msra.mxu0 %v15
  %33 = vmatprep.subr.mxu0 0.0
  %34 = vmatpush1.msra.mxu0 %v16
  %35 = vmatprep.subr.mxu0 0.0
  %36 = vmatpush1.msra.mxu0 %v17
  %37 = vmatprep.subr.mxu0 0.0
  %38 = vmatpush1.msra.mxu0 %v18
  %39 = vmatprep.subr.mxu0 0.0
  %40 = vmatpush1.msra.mxu0 %v19
  %41 = vmatprep.subr.mxu0 0.0
  %42 = vmatpush1.msra.mxu0 %v20
  %43 = vmatprep.subr.mxu0 0.0
  %44 = vmatpush1.msra.mxu0 %v21
  %45 = vmatprep.subr.mxu0 0.0
  %46 = vmatpush1.msra.mxu0 %v22
  %47 = vmatprep.subr.mxu0 0.0
  %48 = vmatpush1.msra.mxu0 %v23
  %49 = vmatprep.subr.mxu0 0.0
  %50 = vmatpush1.msra.mxu0 %v24
  %51 = vmatprep.subr.mxu0 0.0
  %52 = vmatpush1.msra.mxu0 %v25
  %53 = vmatprep.subr.mxu0 0.0
  %54 = vmatpush1.msra.mxu0 %v26
  %55 = vmatprep.subr.mxu0 0.0
  %56 = vmatpush1.msra.mxu0 %v27
  %57 = vmatprep.subr.mxu0 0.0
  %58 = vmatpush1.msra.mxu0 %v28
  %59 = vmatprep.subr.mxu0 0.0
  %60 = vmatpush1.msra.mxu0 %v29
  %61 = vmatprep.subr.mxu0 0.0
  %62 = vmatpush1.msra.mxu0 %v30
  %63 = vmatprep.subr.mxu0 0.0
  %64 = vmatpush1.msra.mxu0 0.0
  %65 = vmatprep.subr.mxu0 0.0
  %66 = vmatpush1.msra.mxu0 0.0
  %67 = vmatprep.subr.mxu0 0.0
  %68 = vmatpush1.msra.mxu0 0.0
  %69 = vmatprep.subr.mxu0 0.0
  %70 = vmatpush1.msra.mxu0 0.0
  %71 = vmatprep.subr.mxu0 0.0
  %72 = vmatpush1.msra.mxu0 0.0
  %73 = vmatprep.subr.mxu0 0.0
  %74 = vmatpush1.msra.mxu0 0.0
  %75 = vmatprep.subr.mxu0 0.0
  %76 = vmatpush1.msra.mxu0 0.0
  %77 = vmatprep.subr.mxu0 0.0
  %78 = vmatpush1.msra.mxu0 0.0
  %79 = vmatprep.subr.mxu0 0.0
  %80 = vmatpush1.msra.mxu0 0.0
  %81 = vmatprep.subr.mxu0 0.0
  %82 = vmatpush1.msra.mxu0 0.0
  %83 = vmatprep.subr.mxu0 0.0
  %84 = vmatpush1.msra.mxu0 0.0
  %85 = vmatprep.subr.mxu0 0.0
  %86 = vmatpush1.msra.mxu0 0.0
  %87 = vmatprep.subr.mxu0 0.0
  %88 = vmatpush1.msra.mxu0 0.0
  %89 = vmatprep.subr.mxu0 0.0
  %90 = vmatpush1.msra.mxu0 0.0
  %91 = vmatprep.subr.mxu0 0.0
  %92 = vmatpush1.msra.mxu0 0.0
  %93 = vmatprep.subr.mxu0 0.0
  %94 = vmatpush1.msra.mxu0 0.0
  %95 = vmatprep.mubr.f32.mxu0 0.0
  %96 = vmatmul.mubr.f32.gmra.mrb[0].mxu0 %v13
  %v97 = vpop.f32.mrb[0].mxu0
  %v98 = vadd.f32 0.0, %v97
  %v99 = vpop.f32.mrb[0].mxu0
  %100 = vmatprep.mubr.f32.mxu0 0.0
  %101 = vmatmul.mubr.f32.gmra.mrb[0].mxu0 %v14
  %v102 = vpop.f32.mrb[0].mxu0
  %v103 = vadd.f32 0.0, %v102
  %v104 = vpop.f32.mrb[0].mxu0
  %105 = vdwg.mxu0
  %vm106 = vcmask 523264
  %v107 = vsel %vm106, %v98, 0.0
  %v108 = vsel %vm106, %v103, 0.0
  %v109 = vadd.f32 %v107, %v108
  %v110 = vrot.slane %v109, 4
  %v111 = vadd.f32 %v109, %v110
  %v112 = vrot.slane %v111, 2
  %v113 = vadd.f32 %v111, %v112
  %v114 = vrot.slane %v113, 1
  %v115 = vadd.f32 %v113, %v114
  %v116 = vmul.f32 %v98, %v98
  %v117 = vmul.f32 %v103, %v103
  %v118 = vsel %vm106, %v116, 0.0
  %v119 = vsel %vm106, %v117, 0.0
  %v120 = vadd.f32 %v118, %v119
  %v121 = vrot.slane %v120, 4
  %v122 = vadd.f32 %v120, %v121
  %v123 = vrot.slane %v122, 2
  %v124 = vadd.f32 %v122, %v123
  %v125 = vrot.slane %v124, 1
  %v126 = vadd.f32 %v124, %v125
  %vm127 = vcmask 1040384
  %v128 = vsel %vm127, %v115, %v126
  %vm129 = vcmask 517120
  %130 = vst.msk [vmem:[%s3] sm:$0x3] %vm129, %v128
  %131 = vst.msk [vmem:[%s2] sm:$0xff] %vm106, %v98
  %132 = vst.msk [vmem:[%s2 + $0x8] sm:$0xff] %vm106, %v103
  // Predicated region
  $region10: #{block_height_reducing_filtering.3} parent=0 // pred_check
    _
  $region11: #{block_height_reducing_filtering.3} parent=0 // pred_check_branch
    %134 = sbr.rel (0) target = $region13
  $region12: #{block_height_reducing_filtering.3} parent=0 // pred_region
    _
  $region13: #{block_height_reducing_filtering.3} parent=0 // pred_fallthru
    _
  // Predicated region
  $region14: #{block_height_reducing_filtering.3} parent=0 // pred_check
    _
  $region15: #{block_height_reducing_filtering.3} parent=0 // pred_check_branch
    %136 = sbr.rel (0) target = $region17
  $region16: #{block_height_reducing_filtering.3} parent=0 // pred_region
    _
  $region17: #{block_height_reducing_filtering.3} parent=0 // pred_fallthru
    _
  // Predicated region
  $region18: #{block_height_reducing_filtering.3} parent=0 // pred_check
    _
  $region19: #{block_height_reducing_filtering.3} parent=0 // pred_check_branch
    %138 = sbr.rel (0) target = $region21
  $region20: #{block_height_reducing_filtering.3} parent=0 // pred_region
    _
  $region21: #{block_height_reducing_filtering.3} parent=0 // pred_fallthru
    _
  // Predicated region
  $region22: #{block_height_reducing_filtering.3} parent=0 // pred_check
    _
  $region23: #{block_height_reducing_filtering.3} parent=0 // pred_check_branch
    %140 = sbr.rel (0) target = $region25
  $region24: #{block_height_reducing_filtering.3} parent=0 // pred_region
    _
  $region25: #{block_height_reducing_filtering.3} parent=0 // pred_fallthru
    _

// kernel: tile.33
$region0: #{tile.33}
  #allocation0 [shape = 's32[1]{0}', space=sflag, size = 0x4, scoped, tag = 'scoped memory for tile.33']
  %s0 = inlined_call_operand.vmem [shape: f32[8], index: 0, kind: input, shape index: {}]
  %s1 = inlined_call_operand.vmem [shape: f32[16,8], index: 1, kind: output, shape index: {}]
  // Predicated region
  $region2: #{tile.33} parent=0 // pred_check
    _
  $region3: #{tile.33} parent=0 // pred_check_branch
    %3 = sbr.rel (0) target = $region5
  $region4: #{tile.33} parent=0 // pred_region
    _
  $region5: #{tile.33} parent=0 // pred_fallthru
    _
  %v4 = vld [vmem:[%s0] ss:$0 sm:$0xff]
  %5 = vst [vmem:[%s1] sm:$0xff] %v4
  %s6 = scalar_lea.vmem %s1, 8
  %7 = vst [vmem:[%s6] sm:$0xff] %v4

// kernel: mul.45
$region0: #{mul.45}
  %s0 = inlined_call_operand.vmem [shape: f32[16,8], index: 0, kind: input, shape index: {}]
  %s1 = inlined_call_operand.vmem [shape: f32[128], index: 1, kind: output, shape index: {}]
  $region1: #{mul.45} parent=0
    #allocation0 [shape = 'u8[4096]{0}', space=vmem, size = 0x1000, scoped, tag = 'scoped mem for output reshape']
    %v2 = vld [vmem:[%s0] sm:$0x1]
    %vm3 = vcmask 64512
    %4 = vst.msk [vmem:[#allocation0] sm:$0x1] %vm3, %v2
    %s5 = scalar_lea.vmem %s0, 15
    %v6 = vld [vmem:[%s5] sm:$0x1]
    %7 = vrot.lane.b32.xlu0 %v6, 120
    %v8 = vpop.permute.xlu0 %7
    %vm9 = vcmask 1048512
    %10 = vst.msk [vmem:[#allocation0] sm:$0x1] %vm9, %v8
    %s11 = scalar_lea.vmem %s0, 14
    %v12 = vld [vmem:[%s11] sm:$0x1]
    %13 = vrot.lane.b32.xlu0 %v12, 112
    %v14 = vpop.permute.xlu0 %13
    %vm15 = vcmask 982912
    %16 = vst.msk [vmem:[#allocation0] sm:$0x1] %vm15, %v14
    %s17 = scalar_lea.vmem %s0, 13
    %v18 = vld [vmem:[%s17] sm:$0x1]
    %19 = vrot.lane.b32.xlu0 %v18, 104
    %v20 = vpop.permute.xlu0 %19
    %vm21 = vcmask 917312
    %22 = vst.msk [vmem:[#allocation0] sm:$0x1] %vm21, %v20
    %s23 = scalar_lea.vmem %s0, 12
    %v24 = vld [vmem:[%s23] sm:$0x1]
    %25 = vrot.lane.b32.xlu0 %v24, 96
    %v26 = vpop.permute.xlu0 %25
    %vm27 = vcmask 851712
    %28 = vst.msk [vmem:[#allocation0] sm:$0x1] %vm27, %v26
    %s29 = scalar_lea.vmem %s0, 11
    %v30 = vld [vmem:[%s29] sm:$0x1]
    %31 = vrot.lane.b32.xlu0 %v30, 88
    %v32 = vpop.permute.xlu0 %31
    %vm33 = vcmask 786112
    %34 = vst.msk [vmem:[#allocation0] sm:$0x1] %vm33, %v32
    %s35 = scalar_lea.vmem %s0, 10
    %v36 = vld [vmem:[%s35] sm:$0x1]
    %37 = vrot.lane.b32.xlu0 %v36, 80
    %v38 = vpop.permute.xlu0 %37
    %vm39 = vcmask 720512
    %40 = vst.msk [vmem:[#allocation0] sm:$0x1] %vm39, %v38
    %s41 = scalar_lea.vmem %s0, 9
    %v42 = vld [vmem:[%s41] sm:$0x1]
    %43 = vrot.lane.b32.xlu0 %v42, 72
    %v44 = vpop.permute.xlu0 %43
    %vm45 = vcmask 654912
    %46 = vst.msk [vmem:[#allocation0] sm:$0x1] %vm45, %v44
    %s47 = scalar_lea.vmem %s0, 8
    %v48 = vld [vmem:[%s47] sm:$0x1]
    %49 = vrot.lane.b32.xlu0 %v48, 64
    %v50 = vpop.permute.xlu0 %49
    %vm51 = vcmask 589312
    %52 = vst.msk [vmem:[#allocation0] sm:$0x1] %vm51, %v50
    %s53 = scalar_lea.vmem %s0, 7
    %v54 = vld [vmem:[%s53] sm:$0x1]
    %55 = vrot.lane.b32.xlu0 %v54, 56
    %v56 = vpop.permute.xlu0 %55
    %vm57 = vcmask 523712
    %58 = vst.msk [vmem:[#allocation0] sm:$0x1] %vm57, %v56
    %s59 = scalar_lea.vmem %s0, 6
    %v60 = vld [vmem:[%s59] sm:$0x1]
    %61 = vrot.lane.b32.xlu0 %v60, 48
    %v62 = vpop.permute.xlu0 %61
    %vm63 = vcmask 458112
    %64 = vst.msk [vmem:[#allocation0] sm:$0x1] %vm63, %v62
    %s65 = scalar_lea.vmem %s0, 5
    %v66 = vld [vmem:[%s65] sm:$0x1]
    %67 = vrot.lane.b32.xlu0 %v66, 40
    %v68 = vpop.permute.xlu0 %67
    %vm69 = vcmask 392512
    %70 = vst.msk [vmem:[#allocation0] sm:$0x1] %vm69, %v68
    %s71 = scalar_lea.vmem %s0, 4
    %v72 = vld [vmem:[%s71] sm:$0x1]
    %73 = vrot.lane.b32.xlu0 %v72, 32
    %v74 = vpop.permute.xlu0 %73
    %vm75 = vcmask 326912
    %76 = vst.msk [vmem:[#allocation0] sm:$0x1] %vm75, %v74
    %s77 = scalar_lea.vmem %s0, 3
    %v78 = vld [vmem:[%s77] sm:$0x1]
    %79 = vrot.lane.b32.xlu0 %v78, 24
    %v80 = vpop.permute.xlu0 %79
    %vm81 = vcmask 261312
    %82 = vst.msk [vmem:[#allocation0] sm:$0x1] %vm81, %v80
    %s83 = scalar_lea.vmem %s0, 2
    %v84 = vld [vmem:[%s83] sm:$0x1]
    %85 = vrot.lane.b32.xlu0 %v84, 16
    %v86 = vpop.permute.xlu0 %85
    %vm87 = vcmask 195712
    %88 = vst.msk [vmem:[#allocation0] sm:$0x1] %vm87, %v86
    %s89 = scalar_lea.vmem %s0, 1
    %v90 = vld [vmem:[%s89] sm:$0x1]
    %91 = vrot.lane.b32.xlu0 %v90, 8
    %v92 = vpop.permute.xlu0 %91
    %vm93 = vcmask 130112
    %94 = vst.msk [vmem:[#allocation0] sm:$0x1] %vm93, %v92
    %s96 = sshllo.u32 0, 1
    %v98 = vld [vmem:[#allocation0] sm:%s96]
    %s99 = sshllo.u32 0, 1
    %100 = vst [vmem:[%s1] sm:%s99] %v98

// kernel: tile.39
$region0: #{tile.39}
  %s0 = inlined_call_operand.vmem [shape: f32[16,8], index: 0, kind: input, shape index: {}]
  %s1 = inlined_call_operand.vmem [shape: f32[1,128], index: 1, kind: output, shape index: {}]
  $region1: #{tile.39} parent=0
    #allocation0 [shape = 'u8[4096]{0}', space=vmem, size = 0x1000, scoped, tag = 'scoped mem for output reshape']
    %v2 = vld [vmem:[%s0] sm:$0x1]
    %vm3 = vcmask 64512
    %4 = vst.msk [vmem:[#allocation0] sm:$0x1] %vm3, %v2
    %s5 = scalar_lea.vmem %s0, 15
    %v6 = vld [vmem:[%s5] sm:$0x1]
    %7 = vrot.lane.b32.xlu0 %v6, 120
    %v8 = vpop.permute.xlu0 %7
    %vm9 = vcmask 1048512
    %10 = vst.msk [vmem:[#allocation0] sm:$0x1] %vm9, %v8
    %s11 = scalar_lea.vmem %s0, 14
    %v12 = vld [vmem:[%s11] sm:$0x1]
    %13 = vrot.lane.b32.xlu0 %v12, 112
    %v14 = vpop.permute.xlu0 %13
    %vm15 = vcmask 982912
    %16 = vst.msk [vmem:[#allocation0] sm:$0x1] %vm15, %v14
    %s17 = scalar_lea.vmem %s0, 13
    %v18 = vld [vmem:[%s17] sm:$0x1]
    %19 = vrot.lane.b32.xlu0 %v18, 104
    %v20 = vpop.permute.xlu0 %19
    %vm21 = vcmask 917312
    %22 = vst.msk [vmem:[#allocation0] sm:$0x1] %vm21, %v20
    %s23 = scalar_lea.vmem %s0, 12
    %v24 = vld [vmem:[%s23] sm:$0x1]
    %25 = vrot.lane.b32.xlu0 %v24, 96
    %v26 = vpop.permute.xlu0 %25
    %vm27 = vcmask 851712
    %28 = vst.msk [vmem:[#allocation0] sm:$0x1] %vm27, %v26
    %s29 = scalar_lea.vmem %s0, 11
    %v30 = vld [vmem:[%s29] sm:$0x1]
    %31 = vrot.lane.b32.xlu0 %v30, 88
    %v32 = vpop.permute.xlu0 %31
    %vm33 = vcmask 786112
    %34 = vst.msk [vmem:[#allocation0] sm:$0x1] %vm33, %v32
    %s35 = scalar_lea.vmem %s0, 10
    %v36 = vld [vmem:[%s35] sm:$0x1]
    %37 = vrot.lane.b32.xlu0 %v36, 80
    %v38 = vpop.permute.xlu0 %37
    %vm39 = vcmask 720512
    %40 = vst.msk [vmem:[#allocation0] sm:$0x1] %vm39, %v38
    %s41 = scalar_lea.vmem %s0, 9
    %v42 = vld [vmem:[%s41] sm:$0x1]
    %43 = vrot.lane.b32.xlu0 %v42, 72
    %v44 = vpop.permute.xlu0 %43
    %vm45 = vcmask 654912
    %46 = vst.msk [vmem:[#allocation0] sm:$0x1] %vm45, %v44
    %s47 = scalar_lea.vmem %s0, 8
    %v48 = vld [vmem:[%s47] sm:$0x1]
    %49 = vrot.lane.b32.xlu0 %v48, 64
    %v50 = vpop.permute.xlu0 %49
    %vm51 = vcmask 589312
    %52 = vst.msk [vmem:[#allocation0] sm:$0x1] %vm51, %v50
    %s53 = scalar_lea.vmem %s0, 7
    %v54 = vld [vmem:[%s53] sm:$0x1]
    %55 = vrot.lane.b32.xlu0 %v54, 56
    %v56 = vpop.permute.xlu0 %55
    %vm57 = vcmask 523712
    %58 = vst.msk [vmem:[#allocation0] sm:$0x1] %vm57, %v56
    %s59 = scalar_lea.vmem %s0, 6
    %v60 = vld [vmem:[%s59] sm:$0x1]
    %61 = vrot.lane.b32.xlu0 %v60, 48
    %v62 = vpop.permute.xlu0 %61
    %vm63 = vcmask 458112
    %64 = vst.msk [vmem:[#allocation0] sm:$0x1] %vm63, %v62
    %s65 = scalar_lea.vmem %s0, 5
    %v66 = vld [vmem:[%s65] sm:$0x1]
    %67 = vrot.lane.b32.xlu0 %v66, 40
    %v68 = vpop.permute.xlu0 %67
    %vm69 = vcmask 392512
    %70 = vst.msk [vmem:[#allocation0] sm:$0x1] %vm69, %v68
    %s71 = scalar_lea.vmem %s0, 4
    %v72 = vld [vmem:[%s71] sm:$0x1]
    %73 = vrot.lane.b32.xlu0 %v72, 32
    %v74 = vpop.permute.xlu0 %73
    %vm75 = vcmask 326912
    %76 = vst.msk [vmem:[#allocation0] sm:$0x1] %vm75, %v74
    %s77 = scalar_lea.vmem %s0, 3
    %v78 = vld [vmem:[%s77] sm:$0x1]
    %79 = vrot.lane.b32.xlu0 %v78, 24
    %v80 = vpop.permute.xlu0 %79
    %vm81 = vcmask 261312
    %82 = vst.msk [vmem:[#allocation0] sm:$0x1] %vm81, %v80
    %s83 = scalar_lea.vmem %s0, 2
    %v84 = vld [vmem:[%s83] sm:$0x1]
    %85 = vrot.lane.b32.xlu0 %v84, 16
    %v86 = vpop.permute.xlu0 %85
    %vm87 = vcmask 195712
    %88 = vst.msk [vmem:[#allocation0] sm:$0x1] %vm87, %v86
    %s89 = scalar_lea.vmem %s0, 1
    %v90 = vld [vmem:[%s89] sm:$0x1]
    %91 = vrot.lane.b32.xlu0 %v90, 8
    %v92 = vpop.permute.xlu0 %91
    %vm93 = vcmask 130112
    %94 = vst.msk [vmem:[#allocation0] sm:$0x1] %vm93, %v92
    %s96 = sshllo.u32 0, 1
    %v98 = vld [vmem:[#allocation0] sm:%s96]
    %s99 = sshllo.u32 0, 1
    %100 = vst [vmem:[%s1] sm:%s99] %v98

// kernel: block_height_reducing_filtering.4
$region0: #{block_height_reducing_filtering.4}
  #allocation0 [shape = 'u32[]', space=smem, size = 0x4, offset = 0x4, fixed_abs, tag = 'smem constant byte address 0x4 - core index']
  #allocation1 [shape = 'u32[144,128]{1,0:T(1,128)}', space=vmem, size = 0x12000, scoped, tag = 'internal scratch']
  %s0 = inlined_call_operand.vmem [shape: f32[16,64], index: 0, kind: input, shape index: {}]
  %s1 = inlined_call_operand.vmem [shape: f32[64,128], index: 1, kind: input, shape index: {}]
  %s2 = inlined_call_operand.vmem [shape: f32[1,64], index: 2, kind: input, shape index: {}]
  %s3 = inlined_call_operand.vmem [shape: f32[1,64], index: 3, kind: input, shape index: {}]
  %s4 = inlined_call_operand.vmem [shape: f32[1,2,128], index: 4, kind: output, shape index: {}]
  %s5 = sld [smem:[#allocation0]]
  $region26: #{block_height_reducing_filtering.4} parent=0
    _
  %s7 = ssub.s32 1, %s5
  %s8 = scalar_select 0, %s7, %s5
  // Predicated region
  $region2: #{block_height_reducing_filtering.4} parent=0 // pred_check
    _
  $region3: #{block_height_reducing_filtering.4} parent=0 // pred_check_branch
    %10 = sbr.rel (0) target = $region5
  $region4: #{block_height_reducing_filtering.4} parent=0 // pred_region
    _
  $region5: #{block_height_reducing_filtering.4} parent=0 // pred_fallthru
    _
  // Predicated region
  $region6: #{block_height_reducing_filtering.4} parent=0 // pred_check
    _
  $region7: #{block_height_reducing_filtering.4} parent=0 // pred_check_branch
    %12 = sbr.rel (0) target = $region9
  $region8: #{block_height_reducing_filtering.4} parent=0 // pred_region
    _
  $region9: #{block_height_reducing_filtering.4} parent=0 // pred_fallthru
    _
  // Predicated region
  $region10: #{block_height_reducing_filtering.4} parent=0 // pred_check
    _
  $region11: #{block_height_reducing_filtering.4} parent=0 // pred_check_branch
    %14 = sbr.rel (0) target = $region13
  $region12: #{block_height_reducing_filtering.4} parent=0 // pred_region
    _
  $region13: #{block_height_reducing_filtering.4} parent=0 // pred_fallthru
    _
  // Predicated region
  $region14: #{block_height_reducing_filtering.4} parent=0 // pred_check
    _
  $region15: #{block_height_reducing_filtering.4} parent=0 // pred_check_branch
    %16 = sbr.rel (0) target = $region17
  $region16: #{block_height_reducing_filtering.4} parent=0 // pred_region
    _
  $region17: #{block_height_reducing_filtering.4} parent=0 // pred_fallthru
    _
  %v17 = vld [vmem:[%s0] sm:$0xff]
  %v18 = vld [vmem:[%s0 + $0x8] sm:$0xff]
  %v19 = vld [vmem:[%s2] sm:$0x1]
  %v21 = vlaneseq
  %v22 = vshrl.u32 %v21, 7
  %v23 = vsub.s32 0, %v22
  %v24 = vrot.slane %v19, %v23
  %v26 = vmul.f32 %v17, %v24
  %v27 = vmul.f32 %v18, %v24
  %v28 = vld [vmem:[%s3] sm:$0x1]
  %v30 = vlaneseq
  %v31 = vshrl.u32 %v30, 7
  %v32 = vsub.s32 0, %v31
  %v33 = vrot.slane %v28, %v32
  %v35 = vadd.f32 %v26, %v33
  %v36 = vadd.f32 %v27, %v33
  %v37 = vmax.f32 %v35, 0.0
  %v38 = vmax.f32 %v36, 0.0
  %s39 = smul.u32 0, 16
  %v40 = vlaneseq
  %v41 = vshrl.u32 %v40, 7
  %v42 = vadd.s32 %v41, 8
  %v43 = vstv %s39
  %v44 = vadd.s32 %v43, %v41
  %v45 = vadd.s32 %v43, %v42
  %vm46 = vcmp.lt.s32.totalorder %v44, 16
  %vm47 = vcmp.lt.s32.totalorder %v45, 16
  %v48 = vsel %vm46, 1, 0
  %v49 = vsel %vm47, 1, 0
  %vm50 = vcmp.eq.s32.totalorder %v48, 1
  %vm51 = vcmp.eq.s32.totalorder %v49, 1
  %v52 = vsel %vm50, %v37, 0.0
  %v53 = vsel %vm51, %v38, 0.0
  %v54 = vld [vmem:[%s1] sm:$0xff]
  %v55 = vld [vmem:[%s1 + $0x8] sm:$0xff]
  %v56 = vld [vmem:[%s1 + $0x10] sm:$0xff]
  %v57 = vld [vmem:[%s1 + $0x18] sm:$0xff]
  %v58 = vld [vmem:[%s1 + $0x20] sm:$0xff]
  %v59 = vld [vmem:[%s1 + $0x28] sm:$0xff]
  %v60 = vld [vmem:[%s1 + $0x30] sm:$0xff]
  %v61 = vld [vmem:[%s1 + $0x38] sm:$0xff]
  %vm62 = vcmask 523264
  %v64 = vsel %vm62, %v52, 0
  %v67 = vsel %vm62, %v53, 0
  %69 = vmatprep.subr.mxu0 0.0
  %70 = vmatpush1.msra.mxu0 %v54
  %71 = vmatprep.subr.mxu0 0.0
  %72 = vmatpush1.msra.mxu0 %v55
  %73 = vmatprep.subr.mxu0 0.0
  %74 = vmatpush1.msra.mxu0 %v56
  %75 = vmatprep.subr.mxu0 0.0
  %76 = vmatpush1.msra.mxu0 %v57
  %77 = vmatprep.subr.mxu0 0.0
  %78 = vmatpush1.msra.mxu0 %v58
  %79 = vmatprep.subr.mxu0 0.0
  %80 = vmatpush1.msra.mxu0 %v59
  %81 = vmatprep.subr.mxu0 0.0
  %82 = vmatpush1.msra.mxu0 %v60
  %83 = vmatprep.subr.mxu0 0.0
  %84 = vmatpush1.msra.mxu0 %v61
  %85 = vmatprep.subr.mxu0 0.0
  %86 = vmatpush1.msra.mxu0 0.0
  %87 = vmatprep.subr.mxu0 0.0
  %88 = vmatpush1.msra.mxu0 0.0
  %89 = vmatprep.subr.mxu0 0.0
  %90 = vmatpush1.msra.mxu0 0.0
  %91 = vmatprep.subr.mxu0 0.0
  %92 = vmatpush1.msra.mxu0 0.0
  %93 = vmatprep.subr.mxu0 0.0
  %94 = vmatpush1.msra.mxu0 0.0
  %95 = vmatprep.subr.mxu0 0.0
  %96 = vmatpush1.msra.mxu0 0.0
  %97 = vmatprep.subr.mxu0 0.0
  %98 = vmatpush1.msra.mxu0 0.0
  %99 = vmatprep.subr.mxu0 0.0
  %100 = vmatpush1.msra.mxu0 0.0
  %101 = vmatprep.subr.mxu0 0.0
  %102 = vmatpush1.msra.mxu0 0.0
  %103 = vmatprep.subr.mxu0 0.0
  %104 = vmatpush1.msra.mxu0 0.0
  %105 = vmatprep.subr.mxu0 0.0
  %106 = vmatpush1.msra.mxu0 0.0
  %107 = vmatprep.subr.mxu0 0.0
  %108 = vmatpush1.msra.mxu0 0.0
  %109 = vmatprep.subr.mxu0 0.0
  %110 = vmatpush1.msra.mxu0 0.0
  %111 = vmatprep.subr.mxu0 0.0
  %112 = vmatpush1.msra.mxu0 0.0
  %113 = vmatprep.subr.mxu0 0.0
  %114 = vmatpush1.msra.mxu0 0.0
  %115 = vmatprep.subr.mxu0 0.0
  %116 = vmatpush1.msra.mxu0 0.0
  %117 = vmatprep.subr.mxu0 0.0
  %118 = vmatpush1.msra.mxu0 0.0
  %119 = vmatprep.subr.mxu0 0.0
  %120 = vmatpush1.msra.mxu0 0.0
  %121 = vmatprep.subr.mxu0 0.0
  %122 = vmatpush1.msra.mxu0 0.0
  %123 = vmatprep.subr.mxu0 0.0
  %124 = vmatpush1.msra.mxu0 0.0
  %125 = vmatprep.subr.mxu0 0.0
  %126 = vmatpush1.msra.mxu0 0.0
  %127 = vmatprep.subr.mxu0 0.0
  %128 = vmatpush1.msra.mxu0 0.0
  %129 = vmatprep.subr.mxu0 0.0
  %130 = vmatpush1.msra.mxu0 0.0
  %131 = vmatprep.subr.mxu0 0.0
  %132 = vmatpush1.msra.mxu0 0.0
  %133 = vmatprep.mubr.f32.mxu0 0.0
  %134 = vmatmul.mubr.f32.gmra.mrb[0].mxu0 %v64
  %v135 = vpop.f32.mrb[0].mxu0
  %v136 = vadd.f32 0.0, %v135
  %v137 = vpop.f32.mrb[0].mxu0
  %138 = vmatprep.mubr.f32.mxu0 0.0
  %139 = vmatmul.mubr.f32.gmra.mrb[0].mxu0 %v67
  %v140 = vpop.f32.mrb[0].mxu0
  %v141 = vadd.f32 0.0, %v140
  %v142 = vpop.f32.mrb[0].mxu0
  %143 = vdwg.mxu0
  %v144 = vadd.f32 %v136, %v141
  %v145 = vrot.slane %v144, 4
  %v146 = vadd.f32 %v144, %v145
  %v147 = vrot.slane %v146, 2
  %v148 = vadd.f32 %v146, %v147
  %v149 = vrot.slane %v148, 1
  %v150 = vadd.f32 %v148, %v149
  %v151 = vmul.f32 %v136, %v136
  %v152 = vmul.f32 %v141, %v141
  %v153 = vadd.f32 %v151, %v152
  %v154 = vrot.slane %v153, 4
  %v155 = vadd.f32 %v153, %v154
  %v156 = vrot.slane %v155, 2
  %v157 = vadd.f32 %v155, %v156
  %v158 = vrot.slane %v157, 1
  %v159 = vadd.f32 %v157, %v158
  %vm160 = vcmask 1040384
  %v161 = vsel %vm160, %v150, %v159
  %162 = vst [vmem:[%s4] sm:$0x3] %v161
  // Predicated region
  $region18: #{block_height_reducing_filtering.4} parent=0 // pred_check
    _
  $region19: #{block_height_reducing_filtering.4} parent=0 // pred_check_branch
    %164 = sbr.rel (0) target = $region21
  $region20: #{block_height_reducing_filtering.4} parent=0 // pred_region
    _
  $region21: #{block_height_reducing_filtering.4} parent=0 // pred_fallthru
    _
  // Predicated region
  $region22: #{block_height_reducing_filtering.4} parent=0 // pred_check
    _
  $region23: #{block_height_reducing_filtering.4} parent=0 // pred_check_branch
    %166 = sbr.rel (0) target = $region25
  $region24: #{block_height_reducing_filtering.4} parent=0 // pred_region
    _
  $region25: #{block_height_reducing_filtering.4} parent=0 // pred_fallthru
    _

// kernel: block_height_reducing_filtering.5
$region0: #{block_height_reducing_filtering.5}
  #allocation0 [shape = 'u32[]', space=smem, size = 0x4, offset = 0x4, fixed_abs, tag = 'smem constant byte address 0x4 - core index']
  #allocation1 [shape = 'u32[144,128]{1,0:T(1,128)}', space=vmem, size = 0x12000, scoped, tag = 'internal scratch']
  %s0 = inlined_call_operand.vmem [shape: f32[16,64], index: 0, kind: input, shape index: {}]
  %s1 = inlined_call_operand.vmem [shape: f32[64,128], index: 1, kind: input, shape index: {}]
  %s2 = inlined_call_operand.vmem [shape: f32[1,64], index: 2, kind: input, shape index: {}]
  %s3 = inlined_call_operand.vmem [shape: f32[1,64], index: 3, kind: input, shape index: {}]
  %s4 = inlined_call_operand.vmem [shape: f32[1,128], index: 4, kind: input, shape index: {}]
  %s5 = inlined_call_operand.vmem [shape: f32[16,128], index: 5, kind: output, shape index: {}]
  %s6 = sld [smem:[#allocation0]]
  $region30: #{block_height_reducing_filtering.5} parent=0
    _
  %s8 = ssub.s32 1, %s6
  %s9 = scalar_select 0, %s8, %s6
  // Predicated region
  $region2: #{block_height_reducing_filtering.5} parent=0 // pred_check
    _
  $region3: #{block_height_reducing_filtering.5} parent=0 // pred_check_branch
    %11 = sbr.rel (0) target = $region5
  $region4: #{block_height_reducing_filtering.5} parent=0 // pred_region
    _
  $region5: #{block_height_reducing_filtering.5} parent=0 // pred_fallthru
    _
  // Predicated region
  $region6: #{block_height_reducing_filtering.5} parent=0 // pred_check
    _
  $region7: #{block_height_reducing_filtering.5} parent=0 // pred_check_branch
    %13 = sbr.rel (0) target = $region9
  $region8: #{block_height_reducing_filtering.5} parent=0 // pred_region
    _
  $region9: #{block_height_reducing_filtering.5} parent=0 // pred_fallthru
    _
  // Predicated region
  $region10: #{block_height_reducing_filtering.5} parent=0 // pred_check
    _
  $region11: #{block_height_reducing_filtering.5} parent=0 // pred_check_branch
    %15 = sbr.rel (0) target = $region13
  $region12: #{block_height_reducing_filtering.5} parent=0 // pred_region
    _
  $region13: #{block_height_reducing_filtering.5} parent=0 // pred_fallthru
    _
  // Predicated region
  $region14: #{block_height_reducing_filtering.5} parent=0 // pred_check
    _
  $region15: #{block_height_reducing_filtering.5} parent=0 // pred_check_branch
    %17 = sbr.rel (0) target = $region17
  $region16: #{block_height_reducing_filtering.5} parent=0 // pred_region
    _
  $region17: #{block_height_reducing_filtering.5} parent=0 // pred_fallthru
    _
  // Predicated region
  $region18: #{block_height_reducing_filtering.5} parent=0 // pred_check
    _
  $region19: #{block_height_reducing_filtering.5} parent=0 // pred_check_branch
    %19 = sbr.rel (0) target = $region21
  $region20: #{block_height_reducing_filtering.5} parent=0 // pred_region
    _
  $region21: #{block_height_reducing_filtering.5} parent=0 // pred_fallthru
    _
  %v20 = vld [vmem:[%s0] sm:$0xff]
  %v21 = vld [vmem:[%s0 + $0x8] sm:$0xff]
  %v22 = vld [vmem:[%s2] sm:$0x1]
  %v24 = vlaneseq
  %v25 = vshrl.u32 %v24, 7
  %v26 = vsub.s32 0, %v25
  %v27 = vrot.slane %v22, %v26
  %v29 = vmul.f32 %v20, %v27
  %v30 = vmul.f32 %v21, %v27
  %v31 = vld [vmem:[%s3] sm:$0x1]
  %v33 = vlaneseq
  %v34 = vshrl.u32 %v33, 7
  %v35 = vsub.s32 0, %v34
  %v36 = vrot.slane %v31, %v35
  %v38 = vadd.f32 %v29, %v36
  %v39 = vadd.f32 %v30, %v36
  %v40 = vmax.f32 %v38, 0.0
  %v41 = vmax.f32 %v39, 0.0
  %v42 = vld [vmem:[%s1] sm:$0xff]
  %v43 = vld [vmem:[%s1 + $0x8] sm:$0xff]
  %v44 = vld [vmem:[%s1 + $0x10] sm:$0xff]
  %v45 = vld [vmem:[%s1 + $0x18] sm:$0xff]
  %v46 = vld [vmem:[%s1 + $0x20] sm:$0xff]
  %v47 = vld [vmem:[%s1 + $0x28] sm:$0xff]
  %v48 = vld [vmem:[%s1 + $0x30] sm:$0xff]
  %v49 = vld [vmem:[%s1 + $0x38] sm:$0xff]
  %v50 = vld [vmem:[%s4] sm:$0x1]
  %v52 = vlaneseq
  %v53 = vshrl.u32 %v52, 7
  %v54 = vsub.s32 0, %v53
  %v55 = vrot.slane %v50, %v54
  %vm57 = vcmask 523264
  %v59 = vsel %vm57, %v40, 0
  %v62 = vsel %vm57, %v41, 0
  %64 = vmatprep.subr.mxu0 0.0
  %65 = vmatpush1.msra.mxu0 %v42
  %66 = vmatprep.subr.mxu0 0.0
  %67 = vmatpush1.msra.mxu0 %v43
  %68 = vmatprep.subr.mxu0 0.0
  %69 = vmatpush1.msra.mxu0 %v44
  %70 = vmatprep.subr.mxu0 0.0
  %71 = vmatpush1.msra.mxu0 %v45
  %72 = vmatprep.subr.mxu0 0.0
  %73 = vmatpush1.msra.mxu0 %v46
  %74 = vmatprep.subr.mxu0 0.0
  %75 = vmatpush1.msra.mxu0 %v47
  %76 = vmatprep.subr.mxu0 0.0
  %77 = vmatpush1.msra.mxu0 %v48
  %78 = vmatprep.subr.mxu0 0.0
  %79 = vmatpush1.msra.mxu0 %v49
  %80 = vmatprep.subr.mxu0 0.0
  %81 = vmatpush1.msra.mxu0 0.0
  %82 = vmatprep.subr.mxu0 0.0
  %83 = vmatpush1.msra.mxu0 0.0
  %84 = vmatprep.subr.mxu0 0.0
  %85 = vmatpush1.msra.mxu0 0.0
  %86 = vmatprep.subr.mxu0 0.0
  %87 = vmatpush1.msra.mxu0 0.0
  %88 = vmatprep.subr.mxu0 0.0
  %89 = vmatpush1.msra.mxu0 0.0
  %90 = vmatprep.subr.mxu0 0.0
  %91 = vmatpush1.msra.mxu0 0.0
  %92 = vmatprep.subr.mxu0 0.0
  %93 = vmatpush1.msra.mxu0 0.0
  %94 = vmatprep.subr.mxu0 0.0
  %95 = vmatpush1.msra.mxu0 0.0
  %96 = vmatprep.subr.mxu0 0.0
  %97 = vmatpush1.msra.mxu0 0.0
  %98 = vmatprep.subr.mxu0 0.0
  %99 = vmatpush1.msra.mxu0 0.0
  %100 = vmatprep.subr.mxu0 0.0
  %101 = vmatpush1.msra.mxu0 0.0
  %102 = vmatprep.subr.mxu0 0.0
  %103 = vmatpush1.msra.mxu0 0.0
  %104 = vmatprep.subr.mxu0 0.0
  %105 = vmatpush1.msra.mxu0 0.0
  %106 = vmatprep.subr.mxu0 0.0
  %107 = vmatpush1.msra.mxu0 0.0
  %108 = vmatprep.subr.mxu0 0.0
  %109 = vmatpush1.msra.mxu0 0.0
  %110 = vmatprep.subr.mxu0 0.0
  %111 = vmatpush1.msra.mxu0 0.0
  %112 = vmatprep.subr.mxu0 0.0
  %113 = vmatpush1.msra.mxu0 0.0
  %114 = vmatprep.subr.mxu0 0.0
  %115 = vmatpush1.msra.mxu0 0.0
  %116 = vmatprep.subr.mxu0 0.0
  %117 = vmatpush1.msra.mxu0 0.0
  %118 = vmatprep.subr.mxu0 0.0
  %119 = vmatpush1.msra.mxu0 0.0
  %120 = vmatprep.subr.mxu0 0.0
  %121 = vmatpush1.msra.mxu0 0.0
  %122 = vmatprep.subr.mxu0 0.0
  %123 = vmatpush1.msra.mxu0 0.0
  %124 = vmatprep.subr.mxu0 0.0
  %125 = vmatpush1.msra.mxu0 0.0
  %126 = vmatprep.subr.mxu0 0.0
  %127 = vmatpush1.msra.mxu0 0.0
  %128 = vmatprep.mubr.f32.mxu0 0.0
  %129 = vmatmul.mubr.f32.gmra.mrb[0].mxu0 %v59
  %v130 = vpop.f32.mrb[0].mxu0
  %v131 = vadd.f32 %v55, %v130
  %v132 = vpop.f32.mrb[0].mxu0
  %133 = vmatprep.mubr.f32.mxu0 0.0
  %134 = vmatmul.mubr.f32.gmra.mrb[0].mxu0 %v62
  %v135 = vpop.f32.mrb[0].mxu0
  %v136 = vadd.f32 %v55, %v135
  %v137 = vpop.f32.mrb[0].mxu0
  %138 = vdwg.mxu0
  %v139 = vmax.f32 %v131, 0.0
  %v140 = vmax.f32 %v136, 0.0
  %141 = vst [vmem:[%s5] sm:$0xff] %v139
  %142 = vst [vmem:[%s5 + $0x8] sm:$0xff] %v140
  // Predicated region
  $region22: #{block_height_reducing_filtering.5} parent=0 // pred_check
    _
  $region23: #{block_height_reducing_filtering.5} parent=0 // pred_check_branch
    %144 = sbr.rel (0) target = $region25
  $region24: #{block_height_reducing_filtering.5} parent=0 // pred_region
    _
  $region25: #{block_height_reducing_filtering.5} parent=0 // pred_fallthru
    _
  // Predicated region
  $region26: #{block_height_reducing_filtering.5} parent=0 // pred_check
    _
  $region27: #{block_height_reducing_filtering.5} parent=0 // pred_check_branch
    %146 = sbr.rel (0) target = $region29
  $region28: #{block_height_reducing_filtering.5} parent=0 // pred_region
    _
  $region29: #{block_height_reducing_filtering.5} parent=0 // pred_fallthru
    _

</llo_original>
